<compile_context>
chip_gen: v6e
topology: v6e:2x2x1
jax: 0.10.0
libtpu: 0.0.40
codegen_flags: <defaults>
</compile_context>

<pallas_src>
import jax
import jax.numpy as jnp
from jax.experimental import pallas as pl
from jax.experimental.pallas import tpu as pltpu

KSIZE = 5
PAD = 2


def basic_block_kernel(x_ref, wconv_ref, bconv_ref, wsel_ref, bfc_ref, out_ref, xpad_scr):
    # x_ref    : (1, C, L)        one batch element
    # wconv_ref: (C, K*C)         conv weight, tap-major flatten: w2d[co, k*C+ci] = w[co, ci, k]
    # bconv_ref: (C, 1)           conv bias (sublane-aligned)
    # wsel_ref : (L, H)           fc2 weight, pre-transposed + zero-interleaved:
    #                             wsel[2j, :] = wfc[:, j], wsel[2j+1, :] = 0
    # bfc_ref  : (1, H)           fc2 bias
    # out_ref  : (1, C, H)
    # xpad_scr : (C, L + 2*PAD + 1)  VMEM scratch holding the zero-padded sample
    C, Lp = xpad_scr.shape
    L = Lp - (2 * PAD + 1)

    # ---- in-kernel zero padding: zero the halo, copy the sample into the middle ----
    xpad_scr[:, :PAD] = jnp.zeros((C, PAD), jnp.float32)
    xpad_scr[:, PAD + L:] = jnp.zeros((C, PAD + 1), jnp.float32)
    xpad_scr[:, PAD:PAD + L] = x_ref[0].astype(jnp.float32)

    w2d = wconv_ref[...].astype(jnp.float32)          # (C, K*C)

    def taps(off):
        # taps(off)[k*C + ci, l] = xpad[ci, l + off + k]   -> (K*C, L)
        return jnp.concatenate(
            [xpad_scr[:, off + k: off + k + L] for k in range(KSIZE)], axis=0)

    # ---- Conv1d(C, C, 5, padding=2) as fused contractions over K*C_in ----
    # conv_a[co, l] = conv output at position l ; conv_b[co, l] = conv output at l+1
    conv_a = jnp.dot(w2d, taps(0), preferred_element_type=jnp.float32)   # (C, L)
    conv_b = jnp.dot(w2d, taps(1), preferred_element_type=jnp.float32)   # (C, L)

    # ---- MaxPool1d(2): even lanes of m hold max(conv[2j], conv[2j+1]) ----
    # (odd lanes are don't-care and are killed by the zero rows of wsel below;
    #  the conv bias is constant per channel, so it can be added after the max)
    m = jnp.maximum(conv_a, conv_b) + bconv_ref[...].astype(jnp.float32)  # (C, L)

    # ---- fc2 (Linear(L/2 -> H)) + ReLU; matmul also performs the stride-2 pick ----
    z = jnp.dot(m, wsel_ref[...].astype(jnp.float32),
                preferred_element_type=jnp.float32) + bfc_ref[...].astype(jnp.float32)
    out_ref[0] = jnp.maximum(z, 0.0).astype(out_ref.dtype)


def basic_block_forward(x, wconv, bconv, wfc, bfc):
    """x: (B, C, L) float32.  Returns (B, C, H) where H = wfc.shape[0]."""
    B, C, L = x.shape
    H, Lh = wfc.shape
    assert L % 2 == 0 and Lh == L // 2

    # One-time wrapper-side weight massaging (cheap, fused/const-folded by XLA):
    #  * conv weight flattened tap-major to (C, K*C) so the conv is a single contraction
    #  * fc2 weight pre-transposed to (Lh, H) and interleaved with zero rows to (L, H)
    #    so the fc2 matmul also downsamples (MaxPool stride 2) -- no in-kernel transpose
    #  * biases shaped (C, 1) / (1, H): already sublane/lane aligned for broadcasting
    w2d = jnp.transpose(wconv, (0, 2, 1)).reshape(C, KSIZE * C)
    wsel = jnp.zeros((L, H), wfc.dtype).at[0::2, :].set(wfc.T)
    bconv2 = bconv.reshape(C, 1)
    bfc2 = bfc.reshape(1, H)

    flops = B * (2 * 2 * C * (KSIZE * C) * L + 2 * C * L * H)
    bytes_accessed = 4 * (x.size + w2d.size + wsel.size + bconv2.size + bfc2.size + B * C * H)

    return pl.pallas_call(
        basic_block_kernel,
        out_shape=jax.ShapeDtypeStruct((B, C, H), x.dtype),
        grid=(B,),
        in_specs=[
            pl.BlockSpec((1, C, L), lambda b: (b, 0, 0)),        # x: one sample per step
            pl.BlockSpec((C, KSIZE * C), lambda b: (0, 0)),      # conv weight (resident)
            pl.BlockSpec((C, 1), lambda b: (0, 0)),              # conv bias
            pl.BlockSpec((L, H), lambda b: (0, 0)),              # fc2 weight (zero-interleaved)
            pl.BlockSpec((1, H), lambda b: (0, 0)),              # fc2 bias
        ],
        out_specs=pl.BlockSpec((1, C, H), lambda b: (b, 0, 0)),
        scratch_shapes=[pltpu.VMEM((C, L + 2 * PAD + 1), jnp.float32)],
        compiler_params=pltpu.CompilerParams(
            dimension_semantics=("parallel",)),
        cost_estimate=pl.CostEstimate(
            flops=flops, transcendentals=0, bytes_accessed=bytes_accessed),
    )(x, w2d, bconv2, wsel, bfc2)


def reference_forward(x, wconv, bconv, wfc, bfc):
    """Pure-JAX reference reproducing the PyTorch semantics."""
    # Conv1d NCL, padding=2
    y = jax.lax.conv_general_dilated(
        x, wconv, window_strides=(1,), padding=[(PAD, PAD)],
        dimension_numbers=("NCH", "OIH", "NCH"))
    y = y + bconv[None, :, None]
    # MaxPool1d(2)
    B, C, L = y.shape
    pooled = jnp.max(y.reshape(B, C, L // 2, 2), axis=-1)
    # Linear + ReLU
    z = jnp.einsum("bcl,hl->bch", pooled, wfc) + bfc[None, None, :]
    return jnp.maximum(z, 0.0)


if __name__ == "__main__":
    B, C, H = 2, 5, 32          # batch, channels=5 (module default), hidden_dim=32
    key = jax.random.PRNGKey(0)
    kx, kw1, kb1, kw2, kb2 = jax.random.split(key, 5)

    x = jax.random.normal(kx, (B, C, H), dtype=jnp.float32)
    # Conv1d(channels, channels, 5): weight (C, C, 5), bias (C,)
    wconv = 0.1 * jax.random.normal(kw1, (C, C, KSIZE), dtype=jnp.float32)
    bconv = 0.1 * jax.random.normal(kb1, (C,), dtype=jnp.float32)
    # Linear(H//2, H): weight (H, H//2), bias (H,)
    wfc = 0.1 * jax.random.normal(kw2, (H, H // 2), dtype=jnp.float32)
    bfc = 0.1 * jax.random.normal(kb2, (H,), dtype=jnp.float32)

    out = basic_block_forward(x, wconv, bconv, wfc, bfc)
    out = jax.block_until_ready(out)

    ref = reference_forward(x, wconv, bconv, wfc, bfc)
    assert out.shape == (B, C, H)
    assert jnp.allclose(out, ref, atol=1e-4, rtol=1e-4), "mismatch vs reference"

    print("KERNEL_OK")
</pallas_src>

<mosaic_0001>
module attributes {stable_mosaic.version = 11 : i64} {
  func.func @basic_block_kernel(%arg0: i32, %arg1: memref<1x5x32xf32, #tpu.memory_space<vmem>>, %arg2: memref<5x25xf32, #tpu.memory_space<vmem>>, %arg3: memref<5x1xf32, #tpu.memory_space<vmem>>, %arg4: memref<32x32xf32, #tpu.memory_space<vmem>>, %arg5: memref<1x32xf32, #tpu.memory_space<vmem>>, %arg6: memref<1x5x32xf32, #tpu.memory_space<vmem>>, %arg7: memref<5x37xf32, #tpu.memory_space<vmem>>) attributes {dimension_semantics = [#tpu.dimension_semantics<parallel>], iteration_bounds = array<i64: 2>, scalar_prefetch = 0 : i64, scratch_operands = 1 : i64, tpu.core_type = #tpu.core_type<tc>, window_params = [{transform_indices = @transform_0, window_bounds = array<i64: 1, 5, 32>}, {pipeline_mode = #tpu.pipeline_mode<synchronous>, transform_indices = @transform_1, window_bounds = array<i64: 5, 25>}, {pipeline_mode = #tpu.pipeline_mode<synchronous>, transform_indices = @transform_2, window_bounds = array<i64: 5, 1>}, {pipeline_mode = #tpu.pipeline_mode<synchronous>, transform_indices = @transform_3, window_bounds = array<i64: 32, 32>}, {pipeline_mode = #tpu.pipeline_mode<synchronous>, transform_indices = @transform_4, window_bounds = array<i64: 1, 32>}, {transform_indices = @transform_5, window_bounds = array<i64: 1, 5, 32>}]} {
    %cst = arith.constant 0.000000e+00 : f32
    %0 = vector.broadcast %cst : f32 to vector<5x2xf32>
    %c0 = arith.constant 0 : index
    %c0_0 = arith.constant 0 : index
    %1 = vector.load %arg7[%c0, %c0_0] : memref<5x37xf32, #tpu.memory_space<vmem>>, vector<5x2xf32>
    tpu.vector_store %arg7[%c0, %c0_0], %0 {strides = array<i32>} : memref<5x37xf32, #tpu.memory_space<vmem>>, vector<5x2xf32>,
    %cst_1 = arith.constant 0.000000e+00 : f32
    %2 = vector.broadcast %cst_1 : f32 to vector<5x3xf32>
    %c0_2 = arith.constant 0 : index
    %c34 = arith.constant 34 : index
    %3 = vector.load %arg7[%c0_2, %c34] : memref<5x37xf32, #tpu.memory_space<vmem>>, vector<5x3xf32>
    tpu.vector_store %arg7[%c0_2, %c34], %2 {strides = array<i32>} : memref<5x37xf32, #tpu.memory_space<vmem>>, vector<5x3xf32>,
    %c0_3 = arith.constant 0 : index
    %c0_4 = arith.constant 0 : index
    %c0_5 = arith.constant 0 : index
    %4 = vector.load %arg1[%c0_3, %c0_4, %c0_5] : memref<1x5x32xf32, #tpu.memory_space<vmem>>, vector<1x5x32xf32>
    %5 = vector.shape_cast %4 : vector<1x5x32xf32> to vector<5x32xf32>
    %c0_6 = arith.constant 0 : index
    %c2 = arith.constant 2 : index
    %6 = vector.load %arg7[%c0_6, %c2] : memref<5x37xf32, #tpu.memory_space<vmem>>, vector<5x32xf32>
    tpu.vector_store %arg7[%c0_6, %c2], %5 {strides = array<i32>} : memref<5x37xf32, #tpu.memory_space<vmem>>, vector<5x32xf32>,
    %c0_7 = arith.constant 0 : index
    %c0_8 = arith.constant 0 : index
    %7 = vector.load %arg2[%c0_7, %c0_8] : memref<5x25xf32, #tpu.memory_space<vmem>>, vector<5x25xf32>
    %c0_9 = arith.constant 0 : index
    %c0_10 = arith.constant 0 : index
    %8 = vector.load %arg7[%c0_9, %c0_10] : memref<5x37xf32, #tpu.memory_space<vmem>>, vector<5x32xf32>
    %c0_11 = arith.constant 0 : index
    %c1 = arith.constant 1 : index
    %9 = vector.load %arg7[%c0_11, %c1] : memref<5x37xf32, #tpu.memory_space<vmem>>, vector<5x32xf32>
    %c0_12 = arith.constant 0 : index
    %c2_13 = arith.constant 2 : index
    %10 = vector.load %arg7[%c0_12, %c2_13] : memref<5x37xf32, #tpu.memory_space<vmem>>, vector<5x32xf32>
    %c0_14 = arith.constant 0 : index
    %c3 = arith.constant 3 : index
    %11 = vector.load %arg7[%c0_14, %c3] : memref<5x37xf32, #tpu.memory_space<vmem>>, vector<5x32xf32>
    %c0_15 = arith.constant 0 : index
    %c4 = arith.constant 4 : index
    %12 = vector.load %arg7[%c0_15, %c4] : memref<5x37xf32, #tpu.memory_space<vmem>>, vector<5x32xf32>
    %13 = tpu.concatenate %8, %9, %10, %11, %12 in 0 : vector<5x32xf32>, vector<5x32xf32>, vector<5x32xf32>, vector<5x32xf32>, vector<5x32xf32> -> vector<25x32xf32>
    %cst_16 = arith.constant dense<0.000000e+00> : vector<5x32xf32>
    %14 = tpu.matmul %7, %13, %cst_16 {dimension_numbers = #tpu.dot_dimension_numbers<[1], [0], [0], [1], [0, 0, 1, 1], [], []>} : vector<5x25xf32>, vector<25x32xf32>, vector<5x32xf32> -> vector<5x32xf32>
    %c0_17 = arith.constant 0 : index
    %c1_18 = arith.constant 1 : index
    %15 = vector.load %arg7[%c0_17, %c1_18] : memref<5x37xf32, #tpu.memory_space<vmem>>, vector<5x32xf32>
    %c0_19 = arith.constant 0 : index
    %c2_20 = arith.constant 2 : index
    %16 = vector.load %arg7[%c0_19, %c2_20] : memref<5x37xf32, #tpu.memory_space<vmem>>, vector<5x32xf32>
    %c0_21 = arith.constant 0 : index
    %c3_22 = arith.constant 3 : index
    %17 = vector.load %arg7[%c0_21, %c3_22] : memref<5x37xf32, #tpu.memory_space<vmem>>, vector<5x32xf32>
    %c0_23 = arith.constant 0 : index
    %c4_24 = arith.constant 4 : index
    %18 = vector.load %arg7[%c0_23, %c4_24] : memref<5x37xf32, #tpu.memory_space<vmem>>, vector<5x32xf32>
    %c0_25 = arith.constant 0 : index
    %c5 = arith.constant 5 : index
    %19 = vector.load %arg7[%c0_25, %c5] : memref<5x37xf32, #tpu.memory_space<vmem>>, vector<5x32xf32>
    %20 = tpu.concatenate %15, %16, %17, %18, %19 in 0 : vector<5x32xf32>, vector<5x32xf32>, vector<5x32xf32>, vector<5x32xf32>, vector<5x32xf32> -> vector<25x32xf32>
    %cst_26 = arith.constant dense<0.000000e+00> : vector<5x32xf32>
    %21 = tpu.matmul %7, %20, %cst_26 {dimension_numbers = #tpu.dot_dimension_numbers<[1], [0], [0], [1], [0, 0, 1, 1], [], []>} : vector<5x25xf32>, vector<25x32xf32>, vector<5x32xf32> -> vector<5x32xf32>
    %22 = arith.maximumf %14, %21 : vector<5x32xf32>
    %c0_27 = arith.constant 0 : index
    %c0_28 = arith.constant 0 : index
    %23 = vector.load %arg3[%c0_27, %c0_28] : memref<5x1xf32, #tpu.memory_space<vmem>>, vector<5x1xf32>
    %24 = vector.broadcast %23 : vector<5x1xf32> to vector<5x32xf32>
    %25 = arith.addf %22, %24 : vector<5x32xf32>
    %c0_29 = arith.constant 0 : index
    %c0_30 = arith.constant 0 : index
    %26 = vector.load %arg4[%c0_29, %c0_30] : memref<32x32xf32, #tpu.memory_space<vmem>>, vector<32x32xf32>
    %cst_31 = arith.constant dense<0.000000e+00> : vector<5x32xf32>
    %27 = tpu.matmul %25, %26, %cst_31 {dimension_numbers = #tpu.dot_dimension_numbers<[1], [0], [0], [1], [0, 0, 1, 1], [], []>} : vector<5x32xf32>, vector<32x32xf32>, vector<5x32xf32> -> vector<5x32xf32>
    %c0_32 = arith.constant 0 : index
    %c0_33 = arith.constant 0 : index
    %28 = vector.load %arg5[%c0_32, %c0_33] : memref<1x32xf32, #tpu.memory_space<vmem>>, vector<1x32xf32>
    %29 = vector.broadcast %28 : vector<1x32xf32> to vector<5x32xf32>
    %30 = arith.addf %27, %29 : vector<5x32xf32>
    %cst_34 = arith.constant 0.000000e+00 : f32
    %31 = vector.broadcast %cst_34 : f32 to vector<5x32xf32>
    %32 = arith.maximumf %30, %31 : vector<5x32xf32>
    %c0_35 = arith.constant 0 : index
    %c0_36 = arith.constant 0 : index
    %c0_37 = arith.constant 0 : index
    %33 = vector.load %arg6[%c0_35, %c0_36, %c0_37] : memref<1x5x32xf32, #tpu.memory_space<vmem>>, vector<1x5x32xf32>
    %34 = vector.shape_cast %33 : vector<1x5x32xf32> to vector<5x32xf32>
    %35 = vector.shape_cast %32 : vector<5x32xf32> to vector<1x5x32xf32>
    tpu.vector_store %arg6[%c0_35, %c0_36, %c0_37], %35 {strides = array<i32>} : memref<1x5x32xf32, #tpu.memory_space<vmem>>, vector<1x5x32xf32>,
    return
  }
  func.func @transform_0(%arg0: i32) -> (i32, i32, i32) {
    %c0_i32 = arith.constant 0 : i32
    %c0_i32_0 = arith.constant 0 : i32
    %c0_i32_1 = arith.constant 0 : i32
    return %arg0, %c0_i32, %c0_i32_0 : i32, i32, i32
  }
  func.func @transform_1(%arg0: i32) -> (i32, i32) {
    %c0_i32 = arith.constant 0 : i32
    %c0_i32_0 = arith.constant 0 : i32
    %c0_i32_1 = arith.constant 0 : i32
    return %c0_i32, %c0_i32_0 : i32, i32
  }
  func.func @transform_2(%arg0: i32) -> (i32, i32) {
    %c0_i32 = arith.constant 0 : i32
    %c0_i32_0 = arith.constant 0 : i32
    %c0_i32_1 = arith.constant 0 : i32
    return %c0_i32, %c0_i32_0 : i32, i32
  }
  func.func @transform_3(%arg0: i32) -> (i32, i32) {
    %c0_i32 = arith.constant 0 : i32
    %c0_i32_0 = arith.constant 0 : i32
    %c0_i32_1 = arith.constant 0 : i32
    return %c0_i32, %c0_i32_0 : i32, i32
  }
  func.func @transform_4(%arg0: i32) -> (i32, i32) {
    %c0_i32 = arith.constant 0 : i32
    %c0_i32_0 = arith.constant 0 : i32
    %c0_i32_1 = arith.constant 0 : i32
    return %c0_i32, %c0_i32_0 : i32, i32
  }
  func.func @transform_5(%arg0: i32) -> (i32, i32, i32) {
    %c0_i32 = arith.constant 0 : i32
    %c0_i32_0 = arith.constant 0 : i32
    %c0_i32_1 = arith.constant 0 : i32
    return %arg0, %c0_i32, %c0_i32_0 : i32, i32, i32
  }
}

</mosaic_0001>

<llo_original>
// kernel: tpu_custom_call.1
$region0: #{tpu_custom_call.1}
  #allocation0 [shape = 'u32[]', space=smem, size = 0x4, offset = 0x4, fixed_abs, tag = 'smem constant byte address 0x4 - core index']
  #allocation1 [shape = 'u32[144,128]{1,0:T(1,128)}', space=vmem, size = 0x12000, scoped, tag = 'internal scratch']
  #allocation2 [shape = 'f32[5,37]{1,0:T(8,128)}', space=vmem, size = 0x1000, scoped, tag = 'scratch operand']
  %s0 = inlined_call_operand.vmem [shape: f32[2,5,32], index: 0, kind: input, shape index: {}]
  %s1 = inlined_call_operand.vmem [shape: f32[5,25], index: 1, kind: input, shape index: {}]
  %s2 = inlined_call_operand.vmem [shape: f32[5,1], index: 2, kind: input, shape index: {}]
  %s3 = inlined_call_operand.vmem [shape: f32[32,32], index: 3, kind: input, shape index: {}]
  %s4 = inlined_call_operand.vmem [shape: f32[1,32], index: 4, kind: input, shape index: {}]
  %s5 = inlined_call_operand.vmem [shape: f32[2,5,32], index: 5, kind: output, shape index: {}]
  %s6 = sld [smem:[#allocation0]]
  $region53: #{tpu_custom_call.1} parent=0
    _
  %s8 = ssub.s32 1, %s6
  %s9 = scalar_select 0, %s8, %s6
  loop: start=0, step=1, limit=4
  $region2: #{tpu_custom_call.1} parent=0 // loop_pre_header
    _
  $region3: #{tpu_custom_call.1} parent=0 // loop_header
    %s11 = sphi 0, %s15
    %p12 = scmp.ge.s32.totalorder %s11, 4
    %s21 = sphi 0, %s23
    %s24 = sphi 0, %s21
    %s25 = sphi 0, %s24
    %s41 = sphi 0, %s25
    %s45 = sphi 0, %s45
    %s47 = sphi 0, %s45
    %s48 = sphi 0, %s47
    %s62 = sphi 0, %s48
    %s66 = sphi 0, %s66
    %s68 = sphi 0, %s66
    %s69 = sphi 0, %s68
    %s83 = sphi 0, %s69
    %s87 = sphi 0, %s87
    %s89 = sphi 0, %s87
    %s90 = sphi 0, %s89
    %s104 = sphi 0, %s90
    %s108 = sphi 0, %s108
    %s110 = sphi 0, %s108
    %s111 = sphi 0, %s110
    %s125 = sphi 0, %s111
    %s131 = sphi 0, %s133
    %s134 = sphi 0, %s131
    %s135 = sphi 0, %s134
    %s151 = sphi 0, %s135
  $region4: #{tpu_custom_call.1} parent=0 // loop_header_branch
    %14 = sbr.rel (%p12) target = $region8
  $region5: #{tpu_custom_call.1} parent=0 // loop_body
    %s16 = ssub.s32 %s11, 1
    %s17 = ssub.s32 %s11, 2
    %s18 = sadd.s32 %s11, 1
    %s19 = ssub.s32 %s11, %s18
    %p20 = scmp.eq.s32.totalorder %s19, 0
    %s22 = sadd.s32 %s21, 1
    %s23 = scalar_select %p20, %s21, %s22
    %p26 = pneg %p20
    %p27 = scmp.eq.s32.totalorder %s11, 1
    %p28 = por %p26, %p27
    %p29 = scmp.ne.s32.totalorder %s21, %s24
    %p30 = scmp.eq.s32.totalorder %s11, 0
    %p31 = por %p29, %p30
    %p32 = scmp.ne.s32.totalorder %s21, %s24
    %p33 = scmp.eq.s32.totalorder %s16, 1
    %p34 = por %p32, %p33
    %p35 = scmp.ne.s32.totalorder %s24, %s25
    %p36 = scmp.eq.s32.totalorder %s16, 0
    %p37 = por %p35, %p36
    %p38 = scmp.ne.s32.totalorder %s24, %s25
    %p39 = scmp.eq.s32.totalorder %s17, 1
    %p40 = por %p38, %p39
    %p42 = scmp.ne.s32.totalorder %s25, %s41
    %p43 = scmp.eq.s32.totalorder %s17, 0
    %p44 = por %p42, %p43
    %s46 = sadd.s32 %s45, 1
    %p49 = scmp.eq.s32.totalorder %s11, 1
    %p50 = scmp.ne.s32.totalorder %s45, %s47
    %p51 = scmp.eq.s32.totalorder %s11, 0
    %p52 = por %p50, %p51
    %p53 = scmp.ne.s32.totalorder %s45, %s47
    %p54 = scmp.eq.s32.totalorder %s16, 1
    %p55 = por %p53, %p54
    %p56 = scmp.ne.s32.totalorder %s47, %s48
    %p57 = scmp.eq.s32.totalorder %s16, 0
    %p58 = por %p56, %p57
    %p59 = scmp.ne.s32.totalorder %s47, %s48
    %p60 = scmp.eq.s32.totalorder %s17, 1
    %p61 = por %p59, %p60
    %p63 = scmp.ne.s32.totalorder %s48, %s62
    %p64 = scmp.eq.s32.totalorder %s17, 0
    %p65 = por %p63, %p64
    %s67 = sadd.s32 %s66, 1
    %p70 = scmp.eq.s32.totalorder %s11, 1
    %p71 = scmp.ne.s32.totalorder %s66, %s68
    %p72 = scmp.eq.s32.totalorder %s11, 0
    %p73 = por %p71, %p72
    %p74 = scmp.ne.s32.totalorder %s66, %s68
    %p75 = scmp.eq.s32.totalorder %s16, 1
    %p76 = por %p74, %p75
    %p77 = scmp.ne.s32.totalorder %s68, %s69
    %p78 = scmp.eq.s32.totalorder %s16, 0
    %p79 = por %p77, %p78
    %p80 = scmp.ne.s32.totalorder %s68, %s69
    %p81 = scmp.eq.s32.totalorder %s17, 1
    %p82 = por %p80, %p81
    %p84 = scmp.ne.s32.totalorder %s69, %s83
    %p85 = scmp.eq.s32.totalorder %s17, 0
    %p86 = por %p84, %p85
    %s88 = sadd.s32 %s87, 1
    %p91 = scmp.eq.s32.totalorder %s11, 1
    %p92 = scmp.ne.s32.totalorder %s87, %s89
    %p93 = scmp.eq.s32.totalorder %s11, 0
    %p94 = por %p92, %p93
    %p95 = scmp.ne.s32.totalorder %s87, %s89
    %p96 = scmp.eq.s32.totalorder %s16, 1
    %p97 = por %p95, %p96
    %p98 = scmp.ne.s32.totalorder %s89, %s90
    %p99 = scmp.eq.s32.totalorder %s16, 0
    %p100 = por %p98, %p99
    %p101 = scmp.ne.s32.totalorder %s89, %s90
    %p102 = scmp.eq.s32.totalorder %s17, 1
    %p103 = por %p101, %p102
    %p105 = scmp.ne.s32.totalorder %s90, %s104
    %p106 = scmp.eq.s32.totalorder %s17, 0
    %p107 = por %p105, %p106
    %s109 = sadd.s32 %s108, 1
    %p112 = scmp.eq.s32.totalorder %s11, 1
    %p113 = scmp.ne.s32.totalorder %s108, %s110
    %p114 = scmp.eq.s32.totalorder %s11, 0
    %p115 = por %p113, %p114
    %p116 = scmp.ne.s32.totalorder %s108, %s110
    %p117 = scmp.eq.s32.totalorder %s16, 1
    %p118 = por %p116, %p117
    %p119 = scmp.ne.s32.totalorder %s110, %s111
    %p120 = scmp.eq.s32.totalorder %s16, 0
    %p121 = por %p119, %p120
    %p122 = scmp.ne.s32.totalorder %s110, %s111
    %p123 = scmp.eq.s32.totalorder %s17, 1
    %p124 = por %p122, %p123
    %p126 = scmp.ne.s32.totalorder %s111, %s125
    %p127 = scmp.eq.s32.totalorder %s17, 0
    %p128 = por %p126, %p127
    %s129 = ssub.s32 %s11, %s18
    %p130 = scmp.eq.s32.totalorder %s129, 0
    %s132 = sadd.s32 %s131, 1
    %s133 = scalar_select %p130, %s131, %s132
    %p136 = pneg %p130
    %p137 = scmp.eq.s32.totalorder %s11, 1
    %p138 = por %p136, %p137
    %p139 = scmp.ne.s32.totalorder %s131, %s134
    %p140 = scmp.eq.s32.totalorder %s11, 0
    %p141 = por %p139, %p140
    %p142 = scmp.ne.s32.totalorder %s131, %s134
    %p143 = scmp.eq.s32.totalorder %s16, 1
    %p144 = por %p142, %p143
    %p145 = scmp.ne.s32.totalorder %s134, %s135
    %p146 = scmp.eq.s32.totalorder %s16, 0
    %p147 = por %p145, %p146
    %p148 = scmp.ne.s32.totalorder %s134, %s135
    %p149 = scmp.eq.s32.totalorder %s17, 1
    %p150 = por %p148, %p149
    %p152 = scmp.ne.s32.totalorder %s135, %s151
    %p153 = scmp.eq.s32.totalorder %s17, 0
    %p154 = por %p152, %p153
    %p155 = scmp.le.s32.totalorder 1, %s11
    %p156 = scmp.lt.s32.totalorder %s11, 3
    %p157 = pnand %p155, %p156
    %p158 = pneg %p157
    // Predicated region
    $region9: #{tpu_custom_call.1} parent=5 // pred_check
      _
    $region10: #{tpu_custom_call.1} parent=5 // pred_check_branch
      %160 = sbr.rel (%p157) target = $region12
    $region11: #{tpu_custom_call.1} parent=5 // pred_region
      %s161 = ssub.s32 %s11, 1
      // Predicated region
      $region13: #{tpu_custom_call.1} parent=11 // pred_check
        %p162 = pneg %p58
      $region14: #{tpu_custom_call.1} parent=11 // pred_check_branch
        %164 = sbr.rel (%p162) target = $region16
      $region15: #{tpu_custom_call.1} parent=11 // pred_region
        _
      $region16: #{tpu_custom_call.1} parent=11 // pred_fallthru
        _
      // Predicated region
      $region17: #{tpu_custom_call.1} parent=11 // pred_check
        %p165 = pneg %p79
      $region18: #{tpu_custom_call.1} parent=11 // pred_check_branch
        %167 = sbr.rel (%p165) target = $region20
      $region19: #{tpu_custom_call.1} parent=11 // pred_region
        _
      $region20: #{tpu_custom_call.1} parent=11 // pred_fallthru
        _
      // Predicated region
      $region21: #{tpu_custom_call.1} parent=11 // pred_check
        %p168 = pneg %p100
      $region22: #{tpu_custom_call.1} parent=11 // pred_check_branch
        %170 = sbr.rel (%p168) target = $region24
      $region23: #{tpu_custom_call.1} parent=11 // pred_region
        _
      $region24: #{tpu_custom_call.1} parent=11 // pred_fallthru
        _
      // Predicated region
      $region25: #{tpu_custom_call.1} parent=11 // pred_check
        %p171 = pneg %p121
      $region26: #{tpu_custom_call.1} parent=11 // pred_check_branch
        %173 = sbr.rel (%p171) target = $region28
      $region27: #{tpu_custom_call.1} parent=11 // pred_region
        _
      $region28: #{tpu_custom_call.1} parent=11 // pred_fallthru
        _
    $region12: #{tpu_custom_call.1} parent=5 // pred_fallthru
      _
    %p174 = scmp.lt.s32.totalorder %s11, 2
    // Predicated region
    $region29: #{tpu_custom_call.1} parent=5 // pred_check
      %p175 = pneg %p174
    $region30: #{tpu_custom_call.1} parent=5 // pred_check_branch
      %177 = sbr.rel (%p175) target = $region32
    $region31: #{tpu_custom_call.1} parent=5 // pred_region
      // Predicated region
      $region33: #{tpu_custom_call.1} parent=31 // pred_check
        %p178 = pneg %p31
      $region34: #{tpu_custom_call.1} parent=31 // pred_check_branch
        %180 = sbr.rel (%p178) target = $region36
      $region35: #{tpu_custom_call.1} parent=31 // pred_region
        %p181 = scmp.lt.s32.totalorder %s11, 1
        %s182 = scalar_select %p181, %s11, 1
        %s183 = smul.addr %s182, 8
        %s184 = scalar_lea.vmem %s0, %s183
      $region36: #{tpu_custom_call.1} parent=31 // pred_fallthru
        _
    $region32: #{tpu_custom_call.1} parent=5 // pred_fallthru
      _
    %p185 = scmp.le.s32.totalorder 1, %s11
    %p186 = scmp.lt.s32.totalorder %s11, 3
    %p187 = pnand %p185, %p186
    %p188 = pneg %p187
    // Predicated region
    $region37: #{tpu_custom_call.1} parent=5 // pred_check
      _
    $region38: #{tpu_custom_call.1} parent=5 // pred_check_branch
      %190 = sbr.rel (%p187) target = $region40
    $region39: #{tpu_custom_call.1} parent=5 // pred_region
      %s191 = ssub.s32 %s11, 1
      %p192 = scmp.lt.s32.totalorder %s16, 1
      %s193 = scalar_select %p192, %s16, 1
      %s194 = smul.addr %s193, 8
      %s195 = scalar_lea.vmem %s0, %s194
      %p196 = pneg %p37
      %p197 = pneg %p34
      %p198 = pneg %p58
      %p199 = pneg %p55
      %p200 = pneg %p79
      %p201 = pneg %p76
      %p202 = pneg %p100
      %p203 = pneg %p97
      %p204 = pneg %p121
      %p205 = pneg %p118
      %p206 = pneg %p147
      %p207 = pneg %p144
      %p208 = scmp.lt.s32.totalorder %s16, 1
      %s209 = scalar_select %p208, %s16, 1
      %s210 = smul.addr %s209, 8
      %s211 = scalar_lea.vmem %s5, %s210
      %p212 = scmp.lt.s32.totalorder %s16, 1
      %s213 = scalar_select %p212, %s16, 1
      %s214 = smul.addr %s213, 8
      %s215 = scalar_lea.vmem %s0, %s214
      %p216 = scmp.lt.s32.totalorder %s16, 1
      %s217 = scalar_select %p216, %s16, 1
      %s218 = smul.addr %s217, 8
      %s219 = scalar_lea.vmem %s5, %s218
      %vm220 = vcmask 12288
      %221 = vst.msk [vmem:[#allocation2] sm:$0x1f] %vm220, 0.0
      %vm222 = vcmask 299280
      %223 = vst.msk [vmem:[#allocation2] sm:$0x1f] %vm222, 0.0
      %v224 = vld [vmem:[%s215] sm:$0x1f]
      %226 = vrot.lane.b32.xlu0 %v224, 2
      %v227 = vpop.permute.xlu0 %226
      %vm229 = vcmask 274448
      %230 = vst.msk [vmem:[#allocation2] sm:$0x1f] %vm229, %v227
      %v231 = vld [vmem:[%s1] sm:$0x1f]
      %v232 = vld [vmem:[#allocation2] sm:$0x1f]
      %v234 = vrot.slane %v232, 3
      %235 = vrot.lane.b32.xlu0 %v234, 127
      %v236 = vpop.permute.xlu0 %235
      %v238 = vrot.slane %v232, 6
      %239 = vrot.lane.b32.xlu0 %v238, 126
      %v240 = vpop.permute.xlu0 %239
      %v242 = vrot.slane %v232, 1
      %243 = vrot.lane.b32.xlu0 %v242, 125
      %v244 = vpop.permute.xlu0 %243
      %v246 = vrot.slane %v232, 4
      %247 = vrot.lane.b32.xlu0 %v246, 124
      %v248 = vpop.permute.xlu0 %247
      %vm250 = vcmask 1044480
      %v251 = vsel %vm250, %v232, %v236
      %vm252 = vcmask 1041408
      %v253 = vsel %vm252, %v236, %v240
      %vm254 = vcmask 1046528
      %v255 = vsel %vm254, %v253, %v244
      %vm256 = vcmask 1043456
      %v257 = vsel %vm256, %v244, %v248
      %vm258 = vcmask 203776
      %v260 = vsel %vm258, %v231, 0
      %vm262 = vcmask 1040384
      %v263 = vsel %vm262, %v248, 0
      %265 = vmatprep.subr.mxu0 0.0
      %266 = vmatpush1.msra.mxu0 0.0
      %267 = vmatprep.subr.mxu0 0.0
      %268 = vmatpush1.msra.mxu0 0.0
      %269 = vmatprep.subr.mxu0 0.0
      %270 = vmatpush1.msra.mxu0 0.0
      %271 = vmatprep.subr.mxu0 0.0
      %272 = vmatpush1.msra.mxu0 0.0
      %273 = vmatprep.subr.mxu0 0.0
      %274 = vmatpush1.msra.mxu0 0.0
      %275 = vmatprep.subr.mxu0 0.0
      %276 = vmatpush1.msra.mxu0 0.0
      %277 = vmatprep.subr.mxu0 0.0
      %278 = vmatpush1.msra.mxu0 0.0
      %279 = vmatprep.subr.mxu0 0.0
      %280 = vmatpush1.msra.mxu0 0.0
      %281 = vmatprep.subr.mxu0 0.0
      %282 = vmatpush1.msra.mxu0 0.0
      %283 = vmatprep.subr.mxu0 0.0
      %284 = vmatpush1.msra.mxu0 0.0
      %285 = vmatprep.subr.mxu0 0.0
      %286 = vmatpush1.msra.mxu0 0.0
      %287 = vmatprep.subr.mxu0 0.0
      %288 = vmatpush1.msra.mxu0 0.0
      %289 = vmatprep.subr.mxu0 0.0
      %290 = vmatpush1.msra.mxu0 %v263
      %291 = vmatprep.subr.mxu0 0.0
      %292 = vmatpush1.msra.mxu0 %v257
      %293 = vmatprep.subr.mxu0 0.0
      %294 = vmatpush1.msra.mxu0 %v255
      %295 = vmatprep.subr.mxu0 0.0
      %296 = vmatpush1.msra.mxu0 %v251
      %297 = vmatprep.subr.mxu0 0.0
      %298 = vmatpush2.msra.mxu0 0.0
      %299 = vmatprep.subr.mxu0 0.0
      %300 = vmatpush2.msra.mxu0 0.0
      %301 = vmatprep.subr.mxu0 0.0
      %302 = vmatpush2.msra.mxu0 0.0
      %303 = vmatprep.subr.mxu0 0.0
      %304 = vmatpush2.msra.mxu0 0.0
      %305 = vmatprep.subr.mxu0 0.0
      %306 = vmatpush2.msra.mxu0 0.0
      %307 = vmatprep.subr.mxu0 0.0
      %308 = vmatpush2.msra.mxu0 0.0
      %309 = vmatprep.subr.mxu0 0.0
      %310 = vmatpush2.msra.mxu0 0.0
      %311 = vmatprep.subr.mxu0 0.0
      %312 = vmatpush2.msra.mxu0 0.0
      %313 = vmatprep.subr.mxu0 0.0
      %314 = vmatpush2.msra.mxu0 0.0
      %315 = vmatprep.subr.mxu0 0.0
      %316 = vmatpush2.msra.mxu0 0.0
      %317 = vmatprep.subr.mxu0 0.0
      %318 = vmatpush2.msra.mxu0 0.0
      %319 = vmatprep.subr.mxu0 0.0
      %320 = vmatpush2.msra.mxu0 0.0
      %321 = vmatprep.subr.mxu0 0.0
      %322 = vmatpush2.msra.mxu0 0.0
      %323 = vmatprep.subr.mxu0 0.0
      %324 = vmatpush2.msra.mxu0 0.0
      %325 = vmatprep.subr.mxu0 0.0
      %326 = vmatpush2.msra.mxu0 0.0
      %327 = vmatprep.subr.mxu0 0.0
      %328 = vmatpush2.msra.mxu0 0.0
      %329 = vmatprep.mubr.f32.mxu0 0.0
      %330 = vmatmul.mubr.f32.gmra.mxu0 %v260
      %v331 = vpop.f32.mrf.mxu0
      %v332 = vadd.f32 0.0, %v331
      %v333 = vpop.f32.mrf.mxu0
      %334 = vdwg.mxu0
      %338 = vrot.lane.b32.xlu0 %v251, 127
      %v339 = vpop.permute.xlu0 %338
      %340 = vrot.lane.b32.xlu0 %v255, 127
      %v341 = vpop.permute.xlu0 %340
      %342 = vrot.lane.b32.xlu0 %v257, 127
      %v343 = vpop.permute.xlu0 %342
      %344 = vrot.lane.b32.xlu0 %v248, 127
      %v345 = vpop.permute.xlu0 %344
      %v349 = vsel %vm262, %v345, 0
      %351 = vmatprep.subr.mxu0 0.0
      %352 = vmatpush1.msra.mxu0 0.0
      %353 = vmatprep.subr.mxu0 0.0
      %354 = vmatpush1.msra.mxu0 0.0
      %355 = vmatprep.subr.mxu0 0.0
      %356 = vmatpush1.msra.mxu0 0.0
      %357 = vmatprep.subr.mxu0 0.0
      %358 = vmatpush1.msra.mxu0 0.0
      %359 = vmatprep.subr.mxu0 0.0
      %360 = vmatpush1.msra.mxu0 0.0
      %361 = vmatprep.subr.mxu0 0.0
      %362 = vmatpush1.msra.mxu0 0.0
      %363 = vmatprep.subr.mxu0 0.0
      %364 = vmatpush1.msra.mxu0 0.0
      %365 = vmatprep.subr.mxu0 0.0
      %366 = vmatpush1.msra.mxu0 0.0
      %367 = vmatprep.subr.mxu0 0.0
      %368 = vmatpush1.msra.mxu0 0.0
      %369 = vmatprep.subr.mxu0 0.0
      %370 = vmatpush1.msra.mxu0 0.0
      %371 = vmatprep.subr.mxu0 0.0
      %372 = vmatpush1.msra.mxu0 0.0
      %373 = vmatprep.subr.mxu0 0.0
      %374 = vmatpush1.msra.mxu0 0.0
      %375 = vmatprep.subr.mxu0 0.0
      %376 = vmatpush1.msra.mxu0 %v349
      %377 = vmatprep.subr.mxu0 0.0
      %378 = vmatpush1.msra.mxu0 %v343
      %379 = vmatprep.subr.mxu0 0.0
      %380 = vmatpush1.msra.mxu0 %v341
      %381 = vmatprep.subr.mxu0 0.0
      %382 = vmatpush1.msra.mxu0 %v339
      %383 = vmatprep.subr.mxu0 0.0
      %384 = vmatpush2.msra.mxu0 0.0
      %385 = vmatprep.subr.mxu0 0.0
      %386 = vmatpush2.msra.mxu0 0.0
      %387 = vmatprep.subr.mxu0 0.0
      %388 = vmatpush2.msra.mxu0 0.0
      %389 = vmatprep.subr.mxu0 0.0
      %390 = vmatpush2.msra.mxu0 0.0
      %391 = vmatprep.subr.mxu0 0.0
      %392 = vmatpush2.msra.mxu0 0.0
      %393 = vmatprep.subr.mxu0 0.0
      %394 = vmatpush2.msra.mxu0 0.0
      %395 = vmatprep.subr.mxu0 0.0
      %396 = vmatpush2.msra.mxu0 0.0
      %397 = vmatprep.subr.mxu0 0.0
      %398 = vmatpush2.msra.mxu0 0.0
      %399 = vmatprep.subr.mxu0 0.0
      %400 = vmatpush2.msra.mxu0 0.0
      %401 = vmatprep.subr.mxu0 0.0
      %402 = vmatpush2.msra.mxu0 0.0
      %403 = vmatprep.subr.mxu0 0.0
      %404 = vmatpush2.msra.mxu0 0.0
      %405 = vmatprep.subr.mxu0 0.0
      %406 = vmatpush2.msra.mxu0 0.0
      %407 = vmatprep.subr.mxu0 0.0
      %408 = vmatpush2.msra.mxu0 0.0
      %409 = vmatprep.subr.mxu0 0.0
      %410 = vmatpush2.msra.mxu0 0.0
      %411 = vmatprep.subr.mxu0 0.0
      %412 = vmatpush2.msra.mxu0 0.0
      %413 = vmatprep.subr.mxu0 0.0
      %414 = vmatpush2.msra.mxu0 0.0
      %415 = vmatprep.mubr.f32.mxu0 0.0
      %416 = vmatmul.mubr.f32.gmra.mxu0 %v260
      %v417 = vpop.f32.mrf.mxu0
      %v418 = vadd.f32 0.0, %v417
      %v419 = vpop.f32.mrf.mxu0
      %420 = vdwg.mxu0
      %v421 = vmax.f32 %v332, %v418
      %v422 = vld [vmem:[%s2] sm:$0x1f]
      %424 = vset.pattern.permute.xlu0 0
      %425 = vperm.xlu0 %424, %v422
      %v426 = vpop.permute.xlu0 %425
      %v428 = vadd.f32 %v421, %v426
      %v429 = vld [vmem:[%s3] sm:$0xff]
      %v430 = vld [vmem:[%s3 + $0x8] sm:$0xff]
      %v431 = vld [vmem:[%s3 + $0x10] sm:$0xff]
      %v432 = vld [vmem:[%s3 + $0x18] sm:$0xff]
      %v433 = vld [vmem:[%s4] sm:$0x1]
      %v435 = vlaneseq
      %v436 = vshrl.u32 %v435, 7
      %v437 = vsub.s32 0, %v436
      %v438 = vrot.slane %v433, %v437
      %vm440 = vcmask 261120
      %v442 = vsel %vm440, %v428, 0
      %444 = vmatprep.subr.mxu0 0.0
      %445 = vmatpush1.msra.mxu0 0.0
      %446 = vmatprep.subr.mxu0 0.0
      %447 = vmatpush1.msra.mxu0 0.0
      %448 = vmatprep.subr.mxu0 0.0
      %449 = vmatpush1.msra.mxu0 0.0
      %450 = vmatprep.subr.mxu0 0.0
      %451 = vmatpush1.msra.mxu0 0.0
      %452 = vmatprep.subr.mxu0 0.0
      %453 = vmatpush1.msra.mxu0 0.0
      %454 = vmatprep.subr.mxu0 0.0
      %455 = vmatpush1.msra.mxu0 0.0
      %456 = vmatprep.subr.mxu0 0.0
      %457 = vmatpush1.msra.mxu0 0.0
      %458 = vmatprep.subr.mxu0 0.0
      %459 = vmatpush1.msra.mxu0 0.0
      %460 = vmatprep.subr.mxu0 0.0
      %461 = vmatpush1.msra.mxu0 0.0
      %462 = vmatprep.subr.mxu0 0.0
      %463 = vmatpush1.msra.mxu0 0.0
      %464 = vmatprep.subr.mxu0 0.0
      %465 = vmatpush1.msra.mxu0 0.0
      %466 = vmatprep.subr.mxu0 0.0
      %467 = vmatpush1.msra.mxu0 0.0
      %468 = vmatprep.subr.mxu0 0.0
      %469 = vmatpush1.msra.mxu0 %v432
      %470 = vmatprep.subr.mxu0 0.0
      %471 = vmatpush1.msra.mxu0 %v431
      %472 = vmatprep.subr.mxu0 0.0
      %473 = vmatpush1.msra.mxu0 %v430
      %474 = vmatprep.subr.mxu0 0.0
      %475 = vmatpush1.msra.mxu0 %v429
      %476 = vmatprep.subr.mxu0 0.0
      %477 = vmatpush2.msra.mxu0 0.0
      %478 = vmatprep.subr.mxu0 0.0
      %479 = vmatpush2.msra.mxu0 0.0
      %480 = vmatprep.subr.mxu0 0.0
      %481 = vmatpush2.msra.mxu0 0.0
      %482 = vmatprep.subr.mxu0 0.0
      %483 = vmatpush2.msra.mxu0 0.0
      %484 = vmatprep.subr.mxu0 0.0
      %485 = vmatpush2.msra.mxu0 0.0
      %486 = vmatprep.subr.mxu0 0.0
      %487 = vmatpush2.msra.mxu0 0.0
      %488 = vmatprep.subr.mxu0 0.0
      %489 = vmatpush2.msra.mxu0 0.0
      %490 = vmatprep.subr.mxu0 0.0
      %491 = vmatpush2.msra.mxu0 0.0
      %492 = vmatprep.subr.mxu0 0.0
      %493 = vmatpush2.msra.mxu0 0.0
      %494 = vmatprep.subr.mxu0 0.0
      %495 = vmatpush2.msra.mxu0 0.0
      %496 = vmatprep.subr.mxu0 0.0
      %497 = vmatpush2.msra.mxu0 0.0
      %498 = vmatprep.subr.mxu0 0.0
      %499 = vmatpush2.msra.mxu0 0.0
      %500 = vmatprep.subr.mxu0 0.0
      %501 = vmatpush2.msra.mxu0 0.0
      %502 = vmatprep.subr.mxu0 0.0
      %503 = vmatpush2.msra.mxu0 0.0
      %504 = vmatprep.subr.mxu0 0.0
      %505 = vmatpush2.msra.mxu0 0.0
      %506 = vmatprep.subr.mxu0 0.0
      %507 = vmatpush2.msra.mxu0 0.0
      %508 = vmatprep.mubr.f32.mxu0 0.0
      %509 = vmatmul.mubr.f32.gmra.mxu0 %v442
      %v510 = vpop.f32.mrf.mxu0
      %v511 = vadd.f32 %v438, %v510
      %v512 = vpop.f32.mrf.mxu0
      %513 = vdwg.mxu0
      %v514 = vmax.f32 %v511, 0.0
      %vm515 = vcmask 258048
      %516 = vst.msk [vmem:[%s219] sm:$0x1f] %vm515, %v514
      %p517 = scmp.lt.s32.totalorder %s16, 1
      %s518 = scalar_select %p517, %s16, 1
      %s519 = smul.addr %s518, 8
      %s520 = scalar_lea.vmem %s5, %s519
      // Predicated region
      $region41: #{tpu_custom_call.1} parent=39 // pred_check
        %p521 = pneg %p144
      $region42: #{tpu_custom_call.1} parent=39 // pred_check_branch
        %523 = sbr.rel (%p521) target = $region44
      $region43: #{tpu_custom_call.1} parent=39 // pred_region
        _
      $region44: #{tpu_custom_call.1} parent=39 // pred_fallthru
        _
    $region40: #{tpu_custom_call.1} parent=5 // pred_fallthru
      _
    %p524 = scmp.le.s32.totalorder 2, %s11
    // Predicated region
    $region45: #{tpu_custom_call.1} parent=5 // pred_check
      %p525 = pneg %p524
    $region46: #{tpu_custom_call.1} parent=5 // pred_check_branch
      %527 = sbr.rel (%p525) target = $region48
    $region47: #{tpu_custom_call.1} parent=5 // pred_region
      %s528 = ssub.s32 %s11, 2
      // Predicated region
      $region49: #{tpu_custom_call.1} parent=47 // pred_check
        %p529 = pneg %p150
      $region50: #{tpu_custom_call.1} parent=47 // pred_check_branch
        %531 = sbr.rel (%p529) target = $region52
      $region51: #{tpu_custom_call.1} parent=47 // pred_region
        %p532 = scmp.lt.s32.totalorder %s17, 1
        %s533 = scalar_select %p532, %s17, 1
        %s534 = smul.addr %s533, 8
        %s535 = scalar_lea.vmem %s5, %s534
      $region52: #{tpu_custom_call.1} parent=47 // pred_fallthru
        _
    $region48: #{tpu_custom_call.1} parent=5 // pred_fallthru
      _
  $region6: #{tpu_custom_call.1} parent=0 // loop_footer
    %s15 = sadd.s32 1, %s11
  $region7: #{tpu_custom_call.1} parent=0 // loop_footer_branch
    %10 = sbr.rel target = $region3
  $region8: #{tpu_custom_call.1} parent=0 // loop_exit
    _

</llo_original>
